<compile_context>
chip_gen: v5e
topology: v5e:2x2
jax: 0.10.0
libtpu: 0.0.40
codegen_flags: <defaults>
</compile_context>

<pallas_src>
import jax
import jax.numpy as jnp
from jax.experimental import pallas as pl
from jax.experimental.pallas import tpu as pltpu


def _round_up(x, m):
    return (x + m - 1) // m * m


def _vmem_cap_bytes():
    """Generation-aware scoped-VMEM ceiling (leave headroom for the compiler)."""
    try:
        cap = pltpu.get_tpu_info().vmem_capacity_bytes
    except Exception:  # conservative fallback (works for v7x's 64 MiB too)
        cap = 64 * 1024 * 1024
    return max(16 * 1024 * 1024, min(cap - 16 * 1024 * 1024, 64 * 1024 * 1024))


# --------------------------------------------------------------------------
# Fast path: whole weight resident in VMEM, grid over batch only.
# --------------------------------------------------------------------------
def _linear_relu_resident_kernel(x_ref, w_ref, b_ref, o_ref):
    # Cast the x tile to the MXU compute dtype in-register (no extra HBM
    # bytes); the full (IN, OUT) weight stays resident for the whole kernel.
    x = x_ref[...].astype(w_ref.dtype)
    acc = jnp.dot(x, w_ref[...], preferred_element_type=jnp.float32)
    o_ref[...] = jnp.maximum(acc + b_ref[...], 0.0).astype(o_ref.dtype)


# --------------------------------------------------------------------------
# Fallback: large weight, tile (OUT, B, K) with K last; accumulate directly
# into the resident f32 output block (no separate scratch).
# --------------------------------------------------------------------------
def _linear_relu_tiled_kernel(x_ref, w_ref, b_ref, o_ref):
    k = pl.program_id(2)

    @pl.when(k == 0)
    def _():
        o_ref[...] = jnp.zeros_like(o_ref)

    o_ref[...] += jnp.dot(x_ref[...].astype(w_ref.dtype), w_ref[...],
                          preferred_element_type=jnp.float32)

    @pl.when(k == pl.num_programs(2) - 1)
    def _():
        o_ref[...] = jnp.maximum(o_ref[...] + b_ref[...], 0.0)


def numeric_feature_adaptor(x, weight, bias, *, use_bf16=True):
    """y = relu(x @ weight.T + bias), matching nn.Linear + F.relu.

    x:      (B, IN)   float32
    weight: (OUT, IN) float32  (PyTorch nn.Linear layout)
    bias:   (OUT,)    float32
    use_bf16: feed the MXU bf16 operands (f32 accumulate + f32 epilogue).
              Set False for a bit-tight match to the f32 reference.
    """
    B, IN = x.shape
    OUT, IN_w = weight.shape
    assert IN_w == IN and bias.shape == (OUT,)

    compute_dtype = jnp.bfloat16 if use_bf16 else x.dtype
    wsize = jnp.dtype(compute_dtype).itemsize

    # One-time parameter prep in the wrapper: transpose to (IN, OUT) so the
    # RHS contracts on dim 0 (no in-kernel transpose possible), cast to the
    # MXU compute dtype.  Bias / epilogue stay f32.
    w_t = weight.T.astype(compute_dtype)                # (IN, OUT)
    b2 = bias.reshape(1, OUT).astype(jnp.float32)       # (1, OUT)

    vmem_cap = _vmem_cap_bytes()

    # ----- Resident-weight footprint estimate (round up to HW tiling). -----
    tm_res = B if B <= 512 else 512
    res_bytes = (_round_up(IN, 16) * _round_up(OUT, 128) * wsize        # W
                 + _round_up(OUT, 128) * 4                               # bias
                 + 2 * tm_res * _round_up(IN, 128) * x.dtype.itemsize    # x (2x buf)
                 + 2 * tm_res * _round_up(OUT, 128) * 4)                 # out (2x buf)

    if res_bytes <= int(0.6 * vmem_cap):
        # ---------------- Common case: weight fully resident. ----------------
        grid = (pl.cdiv(B, tm_res),)
        return pl.pallas_call(
            _linear_relu_resident_kernel,
            out_shape=jax.ShapeDtypeStruct((B, OUT), jnp.float32),
            grid_spec=pltpu.PrefetchScalarGridSpec(
                num_scalar_prefetch=0,
                grid=grid,
                in_specs=[
                    pl.BlockSpec((tm_res, IN), lambda i: (i, 0)),   # x batch tile
                    pl.BlockSpec((IN, OUT), lambda i: (0, 0)),      # W resident
                    pl.BlockSpec((1, OUT), lambda i: (0, 0)),       # bias resident
                ],
                out_specs=pl.BlockSpec((tm_res, OUT), lambda i: (i, 0)),
            ),
            compiler_params=pltpu.CompilerParams(
                dimension_semantics=("parallel",),
                vmem_limit_bytes=min(max(2 * res_bytes, 16 * 2**20), vmem_cap),
            ),
        )(x, w_t, b2)

    # -------------------- Fallback: tiled over (OUT, B, K). --------------------
    tm = B if B <= 512 else 512
    tk = min(1024, _round_up(IN, 256))
    tn = OUT if OUT <= 1024 else 1024
    Kp = _round_up(IN, tk)

    # Zero-pad only the contraction dim (needed for reduction correctness);
    # batch and OUT ragged edges are handled by Pallas partial-block masking.
    xp = x if Kp == IN else jnp.pad(x, ((0, 0), (0, Kp - IN)))
    wtp = w_t if Kp == IN else jnp.pad(w_t, ((0, Kp - IN), (0, 0)))

    grid = (pl.cdiv(OUT, tn), pl.cdiv(B, tm), Kp // tk)

    vmem_bytes = (2 * tm * tk * x.dtype.itemsize      # x tiles
                  + 2 * tk * tn * wsize               # W tiles
                  + 2 * tn * 4                        # bias tiles
                  + 2 * tm * tn * 4)                  # output block
    return pl.pallas_call(
        _linear_relu_tiled_kernel,
        out_shape=jax.ShapeDtypeStruct((B, OUT), jnp.float32),
        grid_spec=pltpu.PrefetchScalarGridSpec(
            num_scalar_prefetch=0,
            grid=grid,
            in_specs=[
                pl.BlockSpec((tm, tk), lambda j, i, k: (i, k)),   # x
                pl.BlockSpec((tk, tn), lambda j, i, k: (k, j)),   # W.T (IN, OUT)
                pl.BlockSpec((1, tn), lambda j, i, k: (0, j)),    # bias
            ],
            out_specs=pl.BlockSpec((tm, tn), lambda j, i, k: (i, j)),
        ),
        compiler_params=pltpu.CompilerParams(
            dimension_semantics=("parallel", "parallel", "arbitrary"),
            vmem_limit_bytes=min(max(2 * vmem_bytes, 16 * 2**20), vmem_cap),
        ),
    )(xp, wtp, b2)


if __name__ == "__main__":
    key = jax.random.PRNGKey(0)
    kx, kw, kb = jax.random.split(key, 3)

    # Small shapes consistent with the module (nn.Linear(IN, OUT) on a batch).
    batch, input_size, output_size = 8, 32, 64
    x = jax.random.normal(kx, (batch, input_size), dtype=jnp.float32)
    weight = jax.random.normal(kw, (output_size, input_size),
                               dtype=jnp.float32) * 0.1
    bias = jax.random.normal(kb, (output_size,), dtype=jnp.float32) * 0.1

    y_ref = jnp.maximum(x @ weight.T + bias, 0.0)

    # Fast path: bf16 MXU operands, f32 accumulate + f32 epilogue.
    y_bf16 = numeric_feature_adaptor(x, weight, bias, use_bf16=True)
    jax.block_until_ready(y_bf16)
    assert y_bf16.shape == (batch, output_size)
    assert jnp.allclose(y_bf16, y_ref, atol=3e-2, rtol=3e-2)

    # Bit-careful path: pure f32, tight match to the PyTorch reference.
    y_f32 = numeric_feature_adaptor(x, weight, bias, use_bf16=False)
    jax.block_until_ready(y_f32)
    assert y_f32.shape == (batch, output_size)
    assert jnp.allclose(y_f32, y_ref, atol=1e-5, rtol=1e-5)

    print("KERNEL_OK")
</pallas_src>

<mosaic_0001>
module attributes {stable_mosaic.version = 11 : i64} {
  func.func @_linear_relu_resident_kernel(%arg0: i32, %arg1: memref<8x32xf32, #tpu.memory_space<vmem>>, %arg2: memref<32x64xbf16, #tpu.memory_space<vmem>>, %arg3: memref<1x64xf32, #tpu.memory_space<vmem>>, %arg4: memref<8x64xf32, #tpu.memory_space<vmem>>) attributes {dimension_semantics = [#tpu.dimension_semantics<parallel>], iteration_bounds = array<i64: 1>, scalar_prefetch = 0 : i64, scratch_operands = 0 : i64, tpu.core_type = #tpu.core_type<tc>, window_params = [{transform_indices = @transform_0, window_bounds = array<i64: 8, 32>}, {pipeline_mode = #tpu.pipeline_mode<synchronous>, transform_indices = @transform_1, window_bounds = array<i64: 32, 64>}, {pipeline_mode = #tpu.pipeline_mode<synchronous>, transform_indices = @transform_2, window_bounds = array<i64: 1, 64>}, {transform_indices = @transform_3, window_bounds = array<i64: 8, 64>}]} {
    %c0 = arith.constant 0 : index
    %c0_0 = arith.constant 0 : index
    %0 = vector.load %arg1[%c0, %c0_0] : memref<8x32xf32, #tpu.memory_space<vmem>>, vector<8x32xf32>
    %1 = arith.truncf %0 : vector<8x32xf32> to vector<8x32xbf16>
    %c0_1 = arith.constant 0 : index
    %c0_2 = arith.constant 0 : index
    %2 = vector.load %arg2[%c0_1, %c0_2] : memref<32x64xbf16, #tpu.memory_space<vmem>>, vector<32x64xbf16>
    %cst = arith.constant dense<0.000000e+00> : vector<8x64xf32>
    %3 = tpu.matmul %1, %2, %cst {dimension_numbers = #tpu.dot_dimension_numbers<[1], [0], [0], [1], [0, 0, 1, 1], [], []>} : vector<8x32xbf16>, vector<32x64xbf16>, vector<8x64xf32> -> vector<8x64xf32>
    %c0_3 = arith.constant 0 : index
    %c0_4 = arith.constant 0 : index
    %4 = vector.load %arg3[%c0_3, %c0_4] : memref<1x64xf32, #tpu.memory_space<vmem>>, vector<1x64xf32>
    %5 = vector.broadcast %4 : vector<1x64xf32> to vector<8x64xf32>
    %6 = arith.addf %3, %5 : vector<8x64xf32>
    %cst_5 = arith.constant 0.000000e+00 : f32
    %7 = vector.broadcast %cst_5 : f32 to vector<8x64xf32>
    %8 = arith.maximumf %6, %7 : vector<8x64xf32>
    %c0_6 = arith.constant 0 : index
    %c0_7 = arith.constant 0 : index
    %9 = vector.load %arg4[%c0_6, %c0_7] : memref<8x64xf32, #tpu.memory_space<vmem>>, vector<8x64xf32>
    tpu.vector_store %arg4[%c0_6, %c0_7], %8 {strides = array<i32>} : memref<8x64xf32, #tpu.memory_space<vmem>>, vector<8x64xf32>,
    return
  }
  func.func @transform_0(%arg0: i32) -> (i32, i32) {
    %c0_i32 = arith.constant 0 : i32
    %c0_i32_0 = arith.constant 0 : i32
    return %arg0, %c0_i32 : i32, i32
  }
  func.func @transform_1(%arg0: i32) -> (i32, i32) {
    %c0_i32 = arith.constant 0 : i32
    %c0_i32_0 = arith.constant 0 : i32
    %c0_i32_1 = arith.constant 0 : i32
    return %c0_i32, %c0_i32_0 : i32, i32
  }
  func.func @transform_2(%arg0: i32) -> (i32, i32) {
    %c0_i32 = arith.constant 0 : i32
    %c0_i32_0 = arith.constant 0 : i32
    %c0_i32_1 = arith.constant 0 : i32
    return %c0_i32, %c0_i32_0 : i32, i32
  }
  func.func @transform_3(%arg0: i32) -> (i32, i32) {
    %c0_i32 = arith.constant 0 : i32
    %c0_i32_0 = arith.constant 0 : i32
    return %arg0, %c0_i32 : i32, i32
  }
}

</mosaic_0001>

<llo_original>
// kernel: tpu_custom_call.1
$region0: #{tpu_custom_call.1}
  #allocation0 [shape = 'u32[]', space=smem, size = 0x4, offset = 0x4, fixed_abs, tag = 'smem constant byte address 0x4 - core index']
  #allocation1 [shape = 'u32[72,128]{1,0:T(1,128)}', space=vmem, size = 0x9000, scoped, tag = 'internal scratch']
  %s0 = inlined_call_operand.hbm [shape: f32[8,32], index: 0, kind: input, shape index: {}]
  %s1 = inlined_call_operand.hbm [shape: bf16[32,64], index: 1, kind: input, shape index: {}]
  %s2 = inlined_call_operand.vmem [shape: f32[1,64], index: 2, kind: input, shape index: {}]
  %s3 = inlined_call_operand.hbm [shape: f32[8,64], index: 3, kind: output, shape index: {}]
  %s4 = sld [smem:[#allocation0]]
  $region30: #{tpu_custom_call.1} parent=0
    _
  %s6 = ssub.s32 1, %s4
  %s7 = scalar_select 0, %s6, %s4
  $region1: #{tpu_custom_call.1} parent=0
    #allocation2 [shape = 'u8[4096]{0}', space=vmem, size = 0x1000, scoped, tag = 'input window, operand 0, single buffered']
    #allocation3 [shape = 's32[1]{0}', space=sflag, size = 0x4, scoped, tag = 'scoped memory for tpu_custom_call.1']
    #allocation4 [shape = 's32[1]{0}', space=sflag, size = 0x4, scoped, tag = 'scoped memory for tpu_custom_call.1']
    #allocation5 [shape = 'u8[8192]{0}', space=vmem, size = 0x2000, scoped, tag = 'input window, operand 1, single buffered']
    #allocation6 [shape = 's32[1]{0}', space=sflag, size = 0x4, scoped, tag = 'scoped memory for tpu_custom_call.1']
    #allocation7 [shape = 'u8[4096]{0}', space=vmem, size = 0x1000, scoped, tag = 'output window, operand 0, single buffered']
    %8 = vsyncpa [#allocation3], 0
    %9 = vsyncpa [#allocation6], 0
    %10 = vsyncpa [#allocation4], 0
    // Predicated region
    $region2: #{tpu_custom_call.1} parent=1 // pred_check
      _
    $region3: #{tpu_custom_call.1} parent=1 // pred_check_branch
      %12 = sbr.rel (0) target = $region5
    $region4: #{tpu_custom_call.1} parent=1 // pred_region
      %14 = vsyncadd [#allocation3], 0
      %s16 = sshll.u32 %s0, 4
      %s17 = int_to_ptr.hbm [resolvable:$true] %s16
      %s18 = sshll.u32 [#allocation2], 4
      %s19 = int_to_ptr.vmem [resolvable:$true] %s18
      %21 = dma.hbm_to_vmem [thread:$0]  %s17, 128, %s19, [#allocation3]
    $region5: #{tpu_custom_call.1} parent=1 // pred_fallthru
      _
    // Predicated region
    $region6: #{tpu_custom_call.1} parent=1 // pred_check
      _
    $region7: #{tpu_custom_call.1} parent=1 // pred_check_branch
      %23 = sbr.rel (0) target = $region9
    $region8: #{tpu_custom_call.1} parent=1 // pred_region
      %25 = vsyncadd [#allocation6], 0
      %s26 = sshll.u32 %s1, 4
      %s27 = int_to_ptr.hbm [resolvable:$true] %s26
      %s28 = sshll.u32 [#allocation5], 4
      %s29 = int_to_ptr.vmem [resolvable:$true] %s28
      %34 = dma.hbm_to_vmem [thread:$0]  %s27, 256, %s29, [#allocation6], 64, 64, 4
    $region9: #{tpu_custom_call.1} parent=1 // pred_fallthru
      _
    // Predicated region
    $region10: #{tpu_custom_call.1} parent=1 // pred_check
      _
    $region11: #{tpu_custom_call.1} parent=1 // pred_check_branch
      %36 = sbr.rel (0) target = $region13
    $region12: #{tpu_custom_call.1} parent=1 // pred_region
      _
    $region13: #{tpu_custom_call.1} parent=1 // pred_fallthru
      _
    // Predicated region
    $region14: #{tpu_custom_call.1} parent=1 // pred_check
      _
    $region15: #{tpu_custom_call.1} parent=1 // pred_check_branch
      %38 = sbr.rel (0) target = $region17
    $region16: #{tpu_custom_call.1} parent=1 // pred_region
      %40 = dma.done [#allocation3], 128
    $region17: #{tpu_custom_call.1} parent=1 // pred_fallthru
      _
    // Predicated region
    $region18: #{tpu_custom_call.1} parent=1 // pred_check
      _
    $region19: #{tpu_custom_call.1} parent=1 // pred_check_branch
      %42 = sbr.rel (0) target = $region21
    $region20: #{tpu_custom_call.1} parent=1 // pred_region
      %44 = dma.done [#allocation6], 256
    $region21: #{tpu_custom_call.1} parent=1 // pred_fallthru
      _
    %v46 = vld [vmem:[#allocation2] sm:$0xff]
    %v47 = vpack.c.bf16 %v46, %v46
    %v48 = vld [vmem:[#allocation5] sm:$0xf]
    %v49 = vld [vmem:[#allocation5 + $0x4] sm:$0xf]
    %v50 = vld [vmem:[#allocation5 + $0x8] sm:$0xf]
    %v51 = vld [vmem:[#allocation5 + $0xc] sm:$0xf]
    %v52 = vld [vmem:[%s2] sm:$0x1]
    %v54 = vperm.slane %v52, 0
    %v60 = vunpack.c.l.b16 %v48
    %v61 = vunpack.c.l.b16 %v49
    %v62 = vunpack.c.l.b16 %v50
    %v63 = vunpack.c.l.b16 %v51
    %v64 = vpack.c.b16 %v61, %v60
    %v65 = vpack.c.b16 %v63, %v62
    %vm68 = vcmask 261120
    %v70 = vsel %vm68, %v47, 0
    %72 = vmatpush.bf16.msra.mxu0 0
    %73 = vmatpush.bf16.msra.mxu0 0
    %74 = vmatpush.bf16.msra.mxu0 0
    %75 = vmatpush.bf16.msra.mxu0 0
    %76 = vmatpush.bf16.msra.mxu0 0
    %77 = vmatpush.bf16.msra.mxu0 0
    %78 = vmatpush.bf16.msra.mxu0 %v65
    %79 = vmatpush.bf16.msra.mxu0 %v64
    %80 = vmatmul.bf16.gmra.mxu0 %v70
    %v81 = vpop.f32.mrf.mxu0
    %v82 = vadd.f32 %v54, %v81
    %v83 = vpop.f32.mrf.mxu0
    %84 = vdwg.mxu0
    %v85 = vmax.f32 %v82, 0.0
    %vm86 = vcmask 523264
    %87 = vst.msk [vmem:[#allocation7] sm:$0xff] %vm86, %v85
    // Predicated region
    $region22: #{tpu_custom_call.1} parent=1 // pred_check
      _
    $region23: #{tpu_custom_call.1} parent=1 // pred_check_branch
      %89 = sbr.rel (0) target = $region25
    $region24: #{tpu_custom_call.1} parent=1 // pred_region
      %91 = vsyncadd [#allocation4], 0
      %s93 = sshll.u32 [#allocation7], 4
      %s94 = int_to_ptr.vmem [resolvable:$true] %s93
      %s95 = sshll.u32 %s3, 4
      %s96 = int_to_ptr.hbm [resolvable:$true] %s95
      %98 = dma.vmem_to_hbm [thread:$0]  %s94, 128, %s96, [#allocation4]
    $region25: #{tpu_custom_call.1} parent=1 // pred_fallthru
      _
    // Predicated region
    $region26: #{tpu_custom_call.1} parent=1 // pred_check
      _
    $region27: #{tpu_custom_call.1} parent=1 // pred_check_branch
      %100 = sbr.rel (0) target = $region29
    $region28: #{tpu_custom_call.1} parent=1 // pred_region
      %102 = dma.done [#allocation4], 128
    $region29: #{tpu_custom_call.1} parent=1 // pred_fallthru
      _
    %103 = vsyncpa [#allocation3], 1
    %104 = vsyncpa [#allocation6], 1
    %105 = vsyncpa [#allocation4], 1

</llo_original>
